<compile_context>
chip_gen: v6e
topology: v6e:2x2x1
jax: 0.10.0
libtpu: 0.0.40
codegen_flags: <defaults>
</compile_context>

<pallas_src>
import math

import jax
import jax.numpy as jnp
from jax.experimental import pallas as pl
from jax.experimental.pallas import tpu as pltpu

LANES = 128


def _make_vae_kernel(B, D, L, F, rows):
    """rows = shared zero-padded contraction (sublane) size of all packed weight blocks;
    the bias strip lives at sublane `rows` of the slab."""
    f32 = jnp.float32

    def kernel(x_ref, eps_ref, w_ref, out_ref):
        w = w_ref[...]          # (rows + 8, 4*128): 4 zero-padded weight blocks + bias strip
        x = x_ref[...]          # (B, D)  raw input (feature gather baked into block-0 rows)
        eps = eps_ref[...]      # (B, L)  reparameterization noise

        def lin(act, k, n_in):  # act: (B, n_in) -> (B, 128)
            wk = w[:n_in, k * LANES:(k + 1) * LANES]
            bk = w[rows:rows + 1, k * LANES:(k + 1) * LANES]
            return jnp.dot(act, wk, preferred_element_type=f32) + bk

        # ---- Encoder: fused hidden[0]@hidden[1] (gather folded into rows), then ReLU
        h = jnp.maximum(lin(x, 0, D), 0.0)                    # valid lanes [0, F//4)
        # ---- Fused [mean | log] head (placed at lane offset D), then ReLU
        ml = jnp.maximum(lin(h[:, :rows], 1, rows), 0.0)      # mean@[D,D+L), log@[D+L,D+2L)

        # ---- re_parameterization: z = mean + exp(log_var / 2) * eps
        z = ml[:, D:D + L] + jnp.exp(ml[:, D + L:D + 2 * L] * 0.5) * eps   # (B, L)

        # ---- Decoder: fused restored@hidden[0] + ReLU, then hidden[1] + sigmoid
        d = jnp.maximum(lin(z, 2, L), 0.0)                    # valid lanes [0, D//2)
        recon = jax.nn.sigmoid(lin(d[:, :rows], 3, rows))     # lanes >= D give 0.5, masked below

        # ---- single lane-dense output: lanes [0,D)=recon, [D,D+2L)=mean|log, rest 0
        lane = jax.lax.broadcasted_iota(jnp.int32, (B, LANES), 1)
        out_ref[...] = jnp.where(lane < D, recon, ml)

    return kernel


def _init_linear(key, in_f, out_f):
    """PyTorch nn.Linear default init; W returned pre-transposed to (in_f, out_f)."""
    kw, kb = jax.random.split(key)
    bound = 1.0 / math.sqrt(in_f)
    w = jax.random.uniform(kw, (in_f, out_f), jnp.float32, -bound, bound)
    b = jax.random.uniform(kb, (1, out_f), jnp.float32, -bound, bound)
    return w, b


def make_vae_params(key, input_shape, latent_dim, max_features,
                    encoder_depth=2, decoder_depth=2):
    assert encoder_depth == 2 and decoder_depth == 2   # kernel written for module defaults
    ks = jax.random.split(key, 7)
    F, L, D = max_features, latent_dim, input_shape
    p = []
    p += _init_linear(ks[0], F, F // 2)        # encoder.hidden[0]
    p += _init_linear(ks[1], F // 2, F // 4)   # encoder.hidden[1]
    p += _init_linear(ks[2], F // 4, L)        # encoder.mean
    p += _init_linear(ks[3], F // 4, L)        # encoder.log
    p += _init_linear(ks[4], L, D // 4)        # decoder.restored
    p += _init_linear(ks[5], D // 4, D // 2)   # decoder.hidden[0]
    p += _init_linear(ks[6], D // 2, D)        # decoder.hidden[1]
    return tuple(p)


def pack_vae_params(params, random_samples, input_shape, latent_dim, max_features):
    """Pack everything into ONE slab: 4 fused, 128-lane-aligned, zero-padded weight blocks
    plus an 8-sublane bias strip.  The feature gather is folded into block 0's rows."""
    (eh0_w, eh0_b, eh1_w, eh1_b, em_w, em_b, el_w, el_b,
     dr_w, dr_b, dh0_w, dh0_b, dh1_w, dh1_b) = params
    D, L, F = input_shape, latent_dim, max_features

    # Host-side fusion of the activation-free linear pairs (f32 rounding-level change only).
    enc_w = eh0_w @ eh1_w                              # (F, F//4)
    enc_b = eh0_b @ eh1_w + eh1_b                      # (1, F//4)
    ml_w = jnp.concatenate([em_w, el_w], axis=1)       # fused [mean | log] weights (F//4, 2L)
    ml_b = jnp.concatenate([em_b, el_b], axis=1)
    dec0_w = dr_w @ dh0_w                              # (L, D//2)
    dec0_b = dr_b @ dh0_w + dh0_b                      # (1, D//2)

    rows = max(8, ((D + 7) // 8) * 8)                  # padded contraction size
    assert D + 2 * L <= LANES and F <= D and D // 2 <= rows and L <= rows

    w_slab = jnp.zeros((rows + 8, 4 * LANES), jnp.float32)
    # block 0: fused encoder weights scattered into the random_samples rows (gather folded in)
    w_slab = w_slab.at[random_samples, 0:enc_w.shape[1]].set(enc_w)
    w_slab = w_slab.at[rows, 0:enc_w.shape[1]].set(enc_b[0])
    # block 1: fused [mean | log] head at lane offset D inside its block
    w_slab = w_slab.at[:ml_w.shape[0], LANES + D:LANES + D + 2 * L].set(ml_w)
    w_slab = w_slab.at[rows, LANES + D:LANES + D + 2 * L].set(ml_b[0])
    # block 2: fused decoder restored@hidden[0]
    w_slab = w_slab.at[:L, 2 * LANES:2 * LANES + D // 2].set(dec0_w)
    w_slab = w_slab.at[rows, 2 * LANES:2 * LANES + D // 2].set(dec0_b[0])
    # block 3: decoder hidden[1]
    w_slab = w_slab.at[:D // 2, 3 * LANES:3 * LANES + D].set(dh1_w)
    w_slab = w_slab.at[rows, 3 * LANES:3 * LANES + D].set(dh1_b[0])
    return w_slab, rows


def vae_forward(w_slab, x, eps, *, input_shape, latent_dim, max_features, rows):
    """Returns (reconstruction, z_mean, z_log) like Vae.forward.  No wrapper-side pre-work:
    raw x, eps and the packed slab go straight into the kernel."""
    D, L, F = input_shape, latent_dim, max_features
    B = x.shape[0]

    kernel = _make_vae_kernel(B, D, L, F, rows)
    vmem = pl.BlockSpec(memory_space=pltpu.MemorySpace.VMEM)
    flops = int(2 * B * LANES * (D + rows + L + rows))
    bytes_accessed = int(4 * (x.size + eps.size + w_slab.size + B * LANES))

    out = pl.pallas_call(
        kernel,
        out_shape=jax.ShapeDtypeStruct((B, LANES), jnp.float32),
        in_specs=[vmem, vmem, vmem],
        out_specs=vmem,
        cost_estimate=pl.CostEstimate(flops=flops,
                                      transcendentals=int(B * (L + D)),
                                      bytes_accessed=bytes_accessed),
    )(x, eps, w_slab)

    recon = out[:, :D]
    z_mean = out[:, D:D + L]
    z_log = out[:, D + L:D + 2 * L]
    return recon, z_mean, z_log


def _reference_forward(params, x, eps, random_samples):
    """Pure-JAX reference mirroring the PyTorch Vae.forward graph (unfused layers)."""
    (eh0_w, eh0_b, eh1_w, eh1_b, em_w, em_b, el_w, el_b,
     dr_w, dr_b, dh0_w, dh0_b, dh1_w, dh1_b) = params
    xs = x[:, random_samples]
    h = xs @ eh0_w + eh0_b
    h = jnp.maximum(h @ eh1_w + eh1_b, 0.0)
    z_mean = jnp.maximum(h @ em_w + em_b, 0.0)
    z_log = jnp.maximum(h @ el_w + el_b, 0.0)
    z = z_mean + jnp.exp(z_log / 2.0) * eps
    d = z @ dr_w + dr_b
    d = jnp.maximum(d @ dh0_w + dh0_b, 0.0)
    recon = jax.nn.sigmoid(d @ dh1_w + dh1_b)
    return recon, z_mean, z_log


if __name__ == "__main__":
    # Small shapes consistent with the module: input_shape=32, latent_dim=8,
    # max_features=8, batch=8, encoder/decoder depth = 2 (module defaults).
    B, D, L, F = 8, 32, 8, 8

    root = jax.random.PRNGKey(0)
    k_param, k_x, k_eps, k_idx = jax.random.split(root, 4)

    params = make_vae_params(k_param, input_shape=D, latent_dim=L, max_features=F)
    # vae.random_samples: F distinct feature indices chosen without replacement
    random_samples = jax.random.permutation(k_idx, D)[:F]
    w_slab, rows = pack_vae_params(params, random_samples, D, L, F)

    x = jax.random.uniform(k_x, (B, D), jnp.float32)       # batch of inputs
    eps = jax.random.normal(k_eps, (B, L), jnp.float32)    # reparameterization noise
    # TODO(synk): torch.randn is drawn inside forward(); here eps is an explicit input so the
    #             kernel stays deterministic and matches the reference bit-for-bit.

    recon, z_mean, z_log = vae_forward(
        w_slab, x, eps,
        input_shape=D, latent_dim=L, max_features=F, rows=rows)
    recon = jax.block_until_ready(recon)
    z_mean = jax.block_until_ready(z_mean)
    z_log = jax.block_until_ready(z_log)

    ref_recon, ref_mean, ref_log = _reference_forward(params, x, eps, random_samples)
    assert recon.shape == (B, D) and z_mean.shape == (B, L) and z_log.shape == (B, L)
    assert jnp.allclose(recon, ref_recon, rtol=2e-3, atol=2e-3)
    assert jnp.allclose(z_mean, ref_mean, rtol=2e-3, atol=2e-3)
    assert jnp.allclose(z_log, ref_log, rtol=2e-3, atol=2e-3)

    print("KERNEL_OK")
</pallas_src>

<mosaic_0001>
module attributes {stable_mosaic.version = 11 : i64} {
  func.func @kernel(%arg0: memref<8x32xf32, #tpu.memory_space<vmem>>, %arg1: memref<8x8xf32, #tpu.memory_space<vmem>>, %arg2: memref<40x512xf32, #tpu.memory_space<vmem>>, %arg3: memref<8x128xf32, #tpu.memory_space<vmem>>) attributes {dimension_semantics = [], scalar_prefetch = 0 : i64, scratch_operands = 0 : i64, tpu.core_type = #tpu.core_type<tc>} {
    %c0 = arith.constant 0 : index
    %c0_0 = arith.constant 0 : index
    %0 = vector.load %arg2[%c0, %c0_0] : memref<40x512xf32, #tpu.memory_space<vmem>>, vector<40x512xf32>
    %c0_1 = arith.constant 0 : index
    %c0_2 = arith.constant 0 : index
    %1 = vector.load %arg0[%c0_1, %c0_2] : memref<8x32xf32, #tpu.memory_space<vmem>>, vector<8x32xf32>
    %c0_3 = arith.constant 0 : index
    %c0_4 = arith.constant 0 : index
    %2 = vector.load %arg1[%c0_3, %c0_4] : memref<8x8xf32, #tpu.memory_space<vmem>>, vector<8x8xf32>
    %3 = vector.extract_strided_slice %0 {offsets = [0, 0], sizes = [32, 128], strides = [1, 1]} : vector<40x512xf32> to vector<32x128xf32>
    %4 = vector.extract_strided_slice %0 {offsets = [32, 0], sizes = [1, 128], strides = [1, 1]} : vector<40x512xf32> to vector<1x128xf32>
    %cst = arith.constant dense<0.000000e+00> : vector<8x128xf32>
    %5 = tpu.matmul %1, %3, %cst {dimension_numbers = #tpu.dot_dimension_numbers<[1], [0], [0], [1], [0, 0, 1, 1], [], []>} : vector<8x32xf32>, vector<32x128xf32>, vector<8x128xf32> -> vector<8x128xf32>
    %6 = vector.broadcast %4 : vector<1x128xf32> to vector<8x128xf32>
    %7 = arith.addf %5, %6 : vector<8x128xf32>
    %cst_5 = arith.constant 0.000000e+00 : f32
    %8 = vector.broadcast %cst_5 : f32 to vector<8x128xf32>
    %9 = arith.maximumf %7, %8 : vector<8x128xf32>
    %10 = vector.extract_strided_slice %9 {offsets = [0, 0], sizes = [8, 32], strides = [1, 1]} : vector<8x128xf32> to vector<8x32xf32>
    %11 = vector.extract_strided_slice %0 {offsets = [0, 128], sizes = [32, 128], strides = [1, 1]} : vector<40x512xf32> to vector<32x128xf32>
    %12 = vector.extract_strided_slice %0 {offsets = [32, 128], sizes = [1, 128], strides = [1, 1]} : vector<40x512xf32> to vector<1x128xf32>
    %cst_6 = arith.constant dense<0.000000e+00> : vector<8x128xf32>
    %13 = tpu.matmul %10, %11, %cst_6 {dimension_numbers = #tpu.dot_dimension_numbers<[1], [0], [0], [1], [0, 0, 1, 1], [], []>} : vector<8x32xf32>, vector<32x128xf32>, vector<8x128xf32> -> vector<8x128xf32>
    %14 = vector.broadcast %12 : vector<1x128xf32> to vector<8x128xf32>
    %15 = arith.addf %13, %14 : vector<8x128xf32>
    %cst_7 = arith.constant 0.000000e+00 : f32
    %16 = vector.broadcast %cst_7 : f32 to vector<8x128xf32>
    %17 = arith.maximumf %15, %16 : vector<8x128xf32>
    %18 = vector.extract_strided_slice %17 {offsets = [0, 32], sizes = [8, 8], strides = [1, 1]} : vector<8x128xf32> to vector<8x8xf32>
    %19 = vector.extract_strided_slice %17 {offsets = [0, 40], sizes = [8, 8], strides = [1, 1]} : vector<8x128xf32> to vector<8x8xf32>
    %cst_8 = arith.constant 5.000000e-01 : f32
    %20 = vector.broadcast %cst_8 : f32 to vector<8x8xf32>
    %21 = arith.mulf %19, %20 : vector<8x8xf32>
    %22 = math.exp %21 : vector<8x8xf32>
    %23 = arith.mulf %22, %2 : vector<8x8xf32>
    %24 = arith.addf %18, %23 : vector<8x8xf32>
    %25 = vector.extract_strided_slice %0 {offsets = [0, 256], sizes = [8, 128], strides = [1, 1]} : vector<40x512xf32> to vector<8x128xf32>
    %26 = vector.extract_strided_slice %0 {offsets = [32, 256], sizes = [1, 128], strides = [1, 1]} : vector<40x512xf32> to vector<1x128xf32>
    %cst_9 = arith.constant dense<0.000000e+00> : vector<8x128xf32>
    %27 = tpu.matmul %24, %25, %cst_9 {dimension_numbers = #tpu.dot_dimension_numbers<[1], [0], [0], [1], [0, 0, 1, 1], [], []>} : vector<8x8xf32>, vector<8x128xf32>, vector<8x128xf32> -> vector<8x128xf32>
    %28 = vector.broadcast %26 : vector<1x128xf32> to vector<8x128xf32>
    %29 = arith.addf %27, %28 : vector<8x128xf32>
    %cst_10 = arith.constant 0.000000e+00 : f32
    %30 = vector.broadcast %cst_10 : f32 to vector<8x128xf32>
    %31 = arith.maximumf %29, %30 : vector<8x128xf32>
    %32 = vector.extract_strided_slice %31 {offsets = [0, 0], sizes = [8, 32], strides = [1, 1]} : vector<8x128xf32> to vector<8x32xf32>
    %33 = vector.extract_strided_slice %0 {offsets = [0, 384], sizes = [32, 128], strides = [1, 1]} : vector<40x512xf32> to vector<32x128xf32>
    %34 = vector.extract_strided_slice %0 {offsets = [32, 384], sizes = [1, 128], strides = [1, 1]} : vector<40x512xf32> to vector<1x128xf32>
    %cst_11 = arith.constant dense<0.000000e+00> : vector<8x128xf32>
    %35 = tpu.matmul %32, %33, %cst_11 {dimension_numbers = #tpu.dot_dimension_numbers<[1], [0], [0], [1], [0, 0, 1, 1], [], []>} : vector<8x32xf32>, vector<32x128xf32>, vector<8x128xf32> -> vector<8x128xf32>
    %36 = vector.broadcast %34 : vector<1x128xf32> to vector<8x128xf32>
    %37 = arith.addf %35, %36 : vector<8x128xf32>
    %38 = arith.negf %37 : vector<8x128xf32>
    %39 = math.exp %38 : vector<8x128xf32>
    %cst_12 = arith.constant 1.000000e+00 : f32
    %40 = vector.broadcast %cst_12 : f32 to vector<8x128xf32>
    %41 = arith.addf %40, %39 : vector<8x128xf32>
    %42 = arith.divf %40, %41 : vector<8x128xf32>
    %43 = tpu.iota {dimensions = array<i32: 1>} : vector<8x128xi32>
    %c32_i32 = arith.constant 32 : i32
    %44 = vector.broadcast %c32_i32 : i32 to vector<8x128xi32>
    %45 = arith.cmpi slt, %43, %44 : vector<8x128xi32>
    %46 = arith.select %45, %42, %17 : vector<8x128xi1>, vector<8x128xf32>
    %c0_13 = arith.constant 0 : index
    %c0_14 = arith.constant 0 : index
    %47 = vector.load %arg3[%c0_13, %c0_14] : memref<8x128xf32, #tpu.memory_space<vmem>>, vector<8x128xf32>
    tpu.vector_store %arg3[%c0_13, %c0_14], %46 {strides = array<i32>} : memref<8x128xf32, #tpu.memory_space<vmem>>, vector<8x128xf32>,
    return
  }
}

</mosaic_0001>

<llo_original>
// kernel: tpu_custom_call.1
$region0: #{tpu_custom_call.1}
  #allocation0 [shape = 'u32[]', space=smem, size = 0x4, offset = 0x4, fixed_abs, tag = 'smem constant byte address 0x4 - core index']
  #allocation1 [shape = 'u32[144,128]{1,0:T(1,128)}', space=vmem, size = 0x12000, scoped, tag = 'internal scratch']
  %s0 = inlined_call_operand.hbm [shape: f32[8,32], index: 0, kind: input, shape index: {}]
  %s1 = inlined_call_operand.hbm [shape: f32[8,8], index: 1, kind: input, shape index: {}]
  %s2 = inlined_call_operand.hbm [shape: f32[40,512], index: 2, kind: input, shape index: {}]
  %s3 = inlined_call_operand.hbm [shape: f32[8,128], index: 3, kind: output, shape index: {}]
  %s4 = sld [smem:[#allocation0]]
  $region34: #{tpu_custom_call.1} parent=0
    _
  %s6 = ssub.s32 1, %s4
  %s7 = scalar_select 0, %s6, %s4
  $region1: #{tpu_custom_call.1} parent=0
    #allocation2 [shape = 'u8[4096]{0}', space=vmem, size = 0x1000, scoped, tag = 'input window, operand 0, single buffered']
    #allocation3 [shape = 's32[1]{0}', space=sflag, size = 0x4, scoped, tag = 'scoped memory for tpu_custom_call.1']
    #allocation4 [shape = 's32[1]{0}', space=sflag, size = 0x4, scoped, tag = 'scoped memory for tpu_custom_call.1']
    #allocation5 [shape = 'u8[4096]{0}', space=vmem, size = 0x1000, scoped, tag = 'input window, operand 1, single buffered']
    #allocation6 [shape = 's32[1]{0}', space=sflag, size = 0x4, scoped, tag = 'scoped memory for tpu_custom_call.1']
    #allocation7 [shape = 'u8[81920]{0}', space=vmem, size = 0x14000, scoped, tag = 'input window, operand 2, single buffered']
    #allocation8 [shape = 'u8[4096]{0}', space=vmem, size = 0x1000, scoped, tag = 'output window, operand 0, single buffered']
    %8 = vsyncpa [#allocation3], 0
    %9 = vsyncpa [#allocation6], 0
    %10 = vsyncpa [#allocation4], 0
    // Predicated region
    $region2: #{tpu_custom_call.1} parent=1 // pred_check
      _
    $region3: #{tpu_custom_call.1} parent=1 // pred_check_branch
      %12 = sbr.rel (0) target = $region5
    $region4: #{tpu_custom_call.1} parent=1 // pred_region
      %s14 = ssub.s32 128, 128
      %15 = vsyncadd [#allocation3], %s14
      %s17 = sshll.u32 [#allocation2], 4
      %s18 = int_to_ptr.vmem [resolvable:$true] %s17
      %20 = dma.hbm_to_vmem [thread:$0]  %s0, 128, %s18, [#allocation3]
    $region5: #{tpu_custom_call.1} parent=1 // pred_fallthru
      _
    // Predicated region
    $region6: #{tpu_custom_call.1} parent=1 // pred_check
      _
    $region7: #{tpu_custom_call.1} parent=1 // pred_check_branch
      %22 = sbr.rel (0) target = $region9
    $region8: #{tpu_custom_call.1} parent=1 // pred_region
      %s24 = ssub.s32 128, 128
      %25 = vsyncadd [#allocation6], %s24
      %s27 = sshll.u32 [#allocation5], 4
      %s28 = int_to_ptr.vmem [resolvable:$true] %s27
      %30 = dma.hbm_to_vmem [thread:$0]  %s1, 128, %s28, [#allocation6]
    $region9: #{tpu_custom_call.1} parent=1 // pred_fallthru
      _
    // Predicated region
    $region10: #{tpu_custom_call.1} parent=1 // pred_check
      _
    $region11: #{tpu_custom_call.1} parent=1 // pred_check_branch
      %32 = sbr.rel (0) target = $region13
    $region12: #{tpu_custom_call.1} parent=1 // pred_region
      %s34 = ssub.s32 2560, 2560
      %35 = vsyncadd [#allocation6], %s34
      %s36 = sshll.u32 [#allocation7], 4
      %s37 = int_to_ptr.vmem [resolvable:$true] %s36
      %42 = dma.hbm_to_vmem [thread:$0]  %s2, 2560, %s37, [#allocation6], 512, 512, 32
    $region13: #{tpu_custom_call.1} parent=1 // pred_fallthru
      _
    // Predicated region
    $region14: #{tpu_custom_call.1} parent=1 // pred_check
      _
    $region15: #{tpu_custom_call.1} parent=1 // pred_check_branch
      %44 = sbr.rel (0) target = $region17
    $region16: #{tpu_custom_call.1} parent=1 // pred_region
      %45 = dma.done [#allocation3], 128
    $region17: #{tpu_custom_call.1} parent=1 // pred_fallthru
      _
    // Predicated region
    $region18: #{tpu_custom_call.1} parent=1 // pred_check
      _
    $region19: #{tpu_custom_call.1} parent=1 // pred_check_branch
      %47 = sbr.rel (0) target = $region21
    $region20: #{tpu_custom_call.1} parent=1 // pred_region
      %48 = dma.done [#allocation6], 128
    $region21: #{tpu_custom_call.1} parent=1 // pred_fallthru
      _
    // Predicated region
    $region22: #{tpu_custom_call.1} parent=1 // pred_check
      _
    $region23: #{tpu_custom_call.1} parent=1 // pred_check_branch
      %50 = sbr.rel (0) target = $region25
    $region24: #{tpu_custom_call.1} parent=1 // pred_region
      %51 = dma.done [#allocation6], 2560
    $region25: #{tpu_custom_call.1} parent=1 // pred_fallthru
      _
    %v52 = vld [vmem:[#allocation7] sm:$0xff]
    %v53 = vld [vmem:[#allocation7 + $0x8] sm:$0xff]
    %v54 = vld [vmem:[#allocation7 + $0x10] sm:$0xff]
    %v55 = vld [vmem:[#allocation7 + $0x18] sm:$0xff]
    %v56 = vld [vmem:[#allocation7 + $0x20] sm:$0xff]
    %v57 = vld [vmem:[#allocation7 + $0x28] sm:$0xff]
    %v58 = vld [vmem:[#allocation7 + $0x38] sm:$0xff]
    %v59 = vld [vmem:[#allocation7 + $0x40] sm:$0xff]
    %v60 = vld [vmem:[#allocation7 + $0x48] sm:$0xff]
    %v61 = vld [vmem:[#allocation7 + $0x58] sm:$0xff]
    %v62 = vld [vmem:[#allocation7 + $0x60] sm:$0xff]
    %v63 = vld [vmem:[#allocation7 + $0x68] sm:$0xff]
    %v64 = vld [vmem:[#allocation7 + $0x78] sm:$0xff]
    %v65 = vld [vmem:[#allocation7 + $0x80] sm:$0xff]
    %v66 = vld [vmem:[#allocation7 + $0x88] sm:$0xff]
    %v67 = vld [vmem:[#allocation7 + $0x90] sm:$0xff]
    %v68 = vld [vmem:[#allocation7 + $0x98] sm:$0xff]
    %v69 = vld [vmem:[#allocation2] sm:$0xff]
    %v70 = vld [vmem:[#allocation5] sm:$0xff]
    %v71 = vlaneseq
    %v72 = vshrl.u32 %v71, 7
    %v73 = vsub.s32 0, %v72
    %v74 = vrot.slane %v65, %v73
    %vm75 = vcmask 261120
    %v77 = vsel %vm75, %v69, 0
    %79 = vmatprep.subr.mxu0 0.0
    %80 = vmatpush1.msra.mxu0 0.0
    %81 = vmatprep.subr.mxu0 0.0
    %82 = vmatpush1.msra.mxu0 0.0
    %83 = vmatprep.subr.mxu0 0.0
    %84 = vmatpush1.msra.mxu0 0.0
    %85 = vmatprep.subr.mxu0 0.0
    %86 = vmatpush1.msra.mxu0 0.0
    %87 = vmatprep.subr.mxu0 0.0
    %88 = vmatpush1.msra.mxu0 0.0
    %89 = vmatprep.subr.mxu0 0.0
    %90 = vmatpush1.msra.mxu0 0.0
    %91 = vmatprep.subr.mxu0 0.0
    %92 = vmatpush1.msra.mxu0 0.0
    %93 = vmatprep.subr.mxu0 0.0
    %94 = vmatpush1.msra.mxu0 0.0
    %95 = vmatprep.subr.mxu0 0.0
    %96 = vmatpush1.msra.mxu0 0.0
    %97 = vmatprep.subr.mxu0 0.0
    %98 = vmatpush1.msra.mxu0 0.0
    %99 = vmatprep.subr.mxu0 0.0
    %100 = vmatpush1.msra.mxu0 0.0
    %101 = vmatprep.subr.mxu0 0.0
    %102 = vmatpush1.msra.mxu0 0.0
    %103 = vmatprep.subr.mxu0 0.0
    %104 = vmatpush1.msra.mxu0 %v62
    %105 = vmatprep.subr.mxu0 0.0
    %106 = vmatpush1.msra.mxu0 %v59
    %107 = vmatprep.subr.mxu0 0.0
    %108 = vmatpush1.msra.mxu0 %v56
    %109 = vmatprep.subr.mxu0 0.0
    %110 = vmatpush1.msra.mxu0 %v52
    %111 = vmatprep.subr.mxu0 0.0
    %112 = vmatpush2.msra.mxu0 0.0
    %113 = vmatprep.subr.mxu0 0.0
    %114 = vmatpush2.msra.mxu0 0.0
    %115 = vmatprep.subr.mxu0 0.0
    %116 = vmatpush2.msra.mxu0 0.0
    %117 = vmatprep.subr.mxu0 0.0
    %118 = vmatpush2.msra.mxu0 0.0
    %119 = vmatprep.subr.mxu0 0.0
    %120 = vmatpush2.msra.mxu0 0.0
    %121 = vmatprep.subr.mxu0 0.0
    %122 = vmatpush2.msra.mxu0 0.0
    %123 = vmatprep.subr.mxu0 0.0
    %124 = vmatpush2.msra.mxu0 0.0
    %125 = vmatprep.subr.mxu0 0.0
    %126 = vmatpush2.msra.mxu0 0.0
    %127 = vmatprep.subr.mxu0 0.0
    %128 = vmatpush2.msra.mxu0 0.0
    %129 = vmatprep.subr.mxu0 0.0
    %130 = vmatpush2.msra.mxu0 0.0
    %131 = vmatprep.subr.mxu0 0.0
    %132 = vmatpush2.msra.mxu0 0.0
    %133 = vmatprep.subr.mxu0 0.0
    %134 = vmatpush2.msra.mxu0 0.0
    %135 = vmatprep.subr.mxu0 0.0
    %136 = vmatpush2.msra.mxu0 0.0
    %137 = vmatprep.subr.mxu0 0.0
    %138 = vmatpush2.msra.mxu0 0.0
    %139 = vmatprep.subr.mxu0 0.0
    %140 = vmatpush2.msra.mxu0 0.0
    %141 = vmatprep.subr.mxu0 0.0
    %142 = vmatpush2.msra.mxu0 0.0
    %143 = vmatprep.mubr.f32.mxu0 0.0
    %144 = vmatmul.mubr.f32.gmra.mxu0 %v77
    %v145 = vpop.f32.mrf.mxu0
    %v146 = vadd.f32 %v74, %v145
    %v147 = vpop.f32.mrf.mxu0
    %148 = vdwg.mxu0
    %v149 = vmax.f32 %v146, 0.0
    %v150 = vlaneseq
    %v151 = vshrl.u32 %v150, 7
    %v152 = vsub.s32 0, %v151
    %v153 = vrot.slane %v66, %v152
    %v155 = vsel %vm75, %v149, 0
    %157 = vmatprep.subr.mxu0 0.0
    %158 = vmatpush1.msra.mxu0 0.0
    %159 = vmatprep.subr.mxu0 0.0
    %160 = vmatpush1.msra.mxu0 0.0
    %161 = vmatprep.subr.mxu0 0.0
    %162 = vmatpush1.msra.mxu0 0.0
    %163 = vmatprep.subr.mxu0 0.0
    %164 = vmatpush1.msra.mxu0 0.0
    %165 = vmatprep.subr.mxu0 0.0
    %166 = vmatpush1.msra.mxu0 0.0
    %167 = vmatprep.subr.mxu0 0.0
    %168 = vmatpush1.msra.mxu0 0.0
    %169 = vmatprep.subr.mxu0 0.0
    %170 = vmatpush1.msra.mxu0 0.0
    %171 = vmatprep.subr.mxu0 0.0
    %172 = vmatpush1.msra.mxu0 0.0
    %173 = vmatprep.subr.mxu0 0.0
    %174 = vmatpush1.msra.mxu0 0.0
    %175 = vmatprep.subr.mxu0 0.0
    %176 = vmatpush1.msra.mxu0 0.0
    %177 = vmatprep.subr.mxu0 0.0
    %178 = vmatpush1.msra.mxu0 0.0
    %179 = vmatprep.subr.mxu0 0.0
    %180 = vmatpush1.msra.mxu0 0.0
    %181 = vmatprep.subr.mxu0 0.0
    %182 = vmatpush1.msra.mxu0 %v63
    %183 = vmatprep.subr.mxu0 0.0
    %184 = vmatpush1.msra.mxu0 %v60
    %185 = vmatprep.subr.mxu0 0.0
    %186 = vmatpush1.msra.mxu0 %v57
    %187 = vmatprep.subr.mxu0 0.0
    %188 = vmatpush1.msra.mxu0 %v53
    %189 = vmatprep.subr.mxu0 0.0
    %190 = vmatpush2.msra.mxu0 0.0
    %191 = vmatprep.subr.mxu0 0.0
    %192 = vmatpush2.msra.mxu0 0.0
    %193 = vmatprep.subr.mxu0 0.0
    %194 = vmatpush2.msra.mxu0 0.0
    %195 = vmatprep.subr.mxu0 0.0
    %196 = vmatpush2.msra.mxu0 0.0
    %197 = vmatprep.subr.mxu0 0.0
    %198 = vmatpush2.msra.mxu0 0.0
    %199 = vmatprep.subr.mxu0 0.0
    %200 = vmatpush2.msra.mxu0 0.0
    %201 = vmatprep.subr.mxu0 0.0
    %202 = vmatpush2.msra.mxu0 0.0
    %203 = vmatprep.subr.mxu0 0.0
    %204 = vmatpush2.msra.mxu0 0.0
    %205 = vmatprep.subr.mxu0 0.0
    %206 = vmatpush2.msra.mxu0 0.0
    %207 = vmatprep.subr.mxu0 0.0
    %208 = vmatpush2.msra.mxu0 0.0
    %209 = vmatprep.subr.mxu0 0.0
    %210 = vmatpush2.msra.mxu0 0.0
    %211 = vmatprep.subr.mxu0 0.0
    %212 = vmatpush2.msra.mxu0 0.0
    %213 = vmatprep.subr.mxu0 0.0
    %214 = vmatpush2.msra.mxu0 0.0
    %215 = vmatprep.subr.mxu0 0.0
    %216 = vmatpush2.msra.mxu0 0.0
    %217 = vmatprep.subr.mxu0 0.0
    %218 = vmatpush2.msra.mxu0 0.0
    %219 = vmatprep.subr.mxu0 0.0
    %220 = vmatpush2.msra.mxu0 0.0
    %221 = vmatprep.mubr.f32.mxu0 0.0
    %222 = vmatmul.mubr.f32.gmra.mxu0 %v155
    %v223 = vpop.f32.mrf.mxu0
    %v224 = vadd.f32 %v153, %v223
    %v225 = vpop.f32.mrf.mxu0
    %226 = vdwg.mxu0
    %v227 = vmax.f32 %v224, 0.0
    %v228 = vmul.f32 %v227, 0.5
    %v229 = vmul.f32 %v228, 1.442695
    %v230 = vpow.pop %v229
    %232 = vrot.lane.b32.xlu0 %v70, 40
    %v233 = vpop.permute.xlu0 %232
    %v235 = vmul.f32 %v230, %v233
    %237 = vrot.lane.b32.xlu0 %v235, 120
    %v238 = vpop.permute.xlu0 %237
    %v240 = vadd.f32 %v227, %v238
    %v241 = vlaneseq
    %v242 = vshrl.u32 %v241, 7
    %v243 = vsub.s32 0, %v242
    %v244 = vrot.slane %v67, %v243
    %246 = vrot.lane.b32.xlu0 %v240, 96
    %v247 = vpop.permute.xlu0 %246
    %vm248 = vcmask 64512
    %v249 = vsel %vm248, %v247, 0
    %251 = vmatprep.subr.mxu0 0.0
    %252 = vmatpush1.msra.mxu0 0.0
    %253 = vmatprep.subr.mxu0 0.0
    %254 = vmatpush1.msra.mxu0 0.0
    %255 = vmatprep.subr.mxu0 0.0
    %256 = vmatpush1.msra.mxu0 0.0
    %257 = vmatprep.subr.mxu0 0.0
    %258 = vmatpush1.msra.mxu0 0.0
    %259 = vmatprep.subr.mxu0 0.0
    %260 = vmatpush1.msra.mxu0 0.0
    %261 = vmatprep.subr.mxu0 0.0
    %262 = vmatpush1.msra.mxu0 0.0
    %263 = vmatprep.subr.mxu0 0.0
    %264 = vmatpush1.msra.mxu0 0.0
    %265 = vmatprep.subr.mxu0 0.0
    %266 = vmatpush1.msra.mxu0 0.0
    %267 = vmatprep.subr.mxu0 0.0
    %268 = vmatpush1.msra.mxu0 0.0
    %269 = vmatprep.subr.mxu0 0.0
    %270 = vmatpush1.msra.mxu0 0.0
    %271 = vmatprep.subr.mxu0 0.0
    %272 = vmatpush1.msra.mxu0 0.0
    %273 = vmatprep.subr.mxu0 0.0
    %274 = vmatpush1.msra.mxu0 0.0
    %275 = vmatprep.subr.mxu0 0.0
    %276 = vmatpush1.msra.mxu0 0.0
    %277 = vmatprep.subr.mxu0 0.0
    %278 = vmatpush1.msra.mxu0 0.0
    %279 = vmatprep.subr.mxu0 0.0
    %280 = vmatpush1.msra.mxu0 0.0
    %281 = vmatprep.subr.mxu0 0.0
    %282 = vmatpush1.msra.mxu0 %v54
    %283 = vmatprep.subr.mxu0 0.0
    %284 = vmatpush2.msra.mxu0 0.0
    %285 = vmatprep.subr.mxu0 0.0
    %286 = vmatpush2.msra.mxu0 0.0
    %287 = vmatprep.subr.mxu0 0.0
    %288 = vmatpush2.msra.mxu0 0.0
    %289 = vmatprep.subr.mxu0 0.0
    %290 = vmatpush2.msra.mxu0 0.0
    %291 = vmatprep.subr.mxu0 0.0
    %292 = vmatpush2.msra.mxu0 0.0
    %293 = vmatprep.subr.mxu0 0.0
    %294 = vmatpush2.msra.mxu0 0.0
    %295 = vmatprep.subr.mxu0 0.0
    %296 = vmatpush2.msra.mxu0 0.0
    %297 = vmatprep.subr.mxu0 0.0
    %298 = vmatpush2.msra.mxu0 0.0
    %299 = vmatprep.subr.mxu0 0.0
    %300 = vmatpush2.msra.mxu0 0.0
    %301 = vmatprep.subr.mxu0 0.0
    %302 = vmatpush2.msra.mxu0 0.0
    %303 = vmatprep.subr.mxu0 0.0
    %304 = vmatpush2.msra.mxu0 0.0
    %305 = vmatprep.subr.mxu0 0.0
    %306 = vmatpush2.msra.mxu0 0.0
    %307 = vmatprep.subr.mxu0 0.0
    %308 = vmatpush2.msra.mxu0 0.0
    %309 = vmatprep.subr.mxu0 0.0
    %310 = vmatpush2.msra.mxu0 0.0
    %311 = vmatprep.subr.mxu0 0.0
    %312 = vmatpush2.msra.mxu0 0.0
    %313 = vmatprep.subr.mxu0 0.0
    %314 = vmatpush2.msra.mxu0 0.0
    %315 = vmatprep.mubr.f32.mxu0 0.0
    %316 = vmatmul.mubr.f32.gmra.mxu0 %v249
    %v317 = vpop.f32.mrf.mxu0
    %v318 = vadd.f32 %v244, %v317
    %v319 = vpop.f32.mrf.mxu0
    %320 = vdwg.mxu0
    %v321 = vmax.f32 %v318, 0.0
    %v322 = vlaneseq
    %v323 = vshrl.u32 %v322, 7
    %v324 = vsub.s32 0, %v323
    %v325 = vrot.slane %v68, %v324
    %v327 = vsel %vm75, %v321, 0
    %329 = vmatprep.subr.mxu0 0.0
    %330 = vmatpush1.msra.mxu0 0.0
    %331 = vmatprep.subr.mxu0 0.0
    %332 = vmatpush1.msra.mxu0 0.0
    %333 = vmatprep.subr.mxu0 0.0
    %334 = vmatpush1.msra.mxu0 0.0
    %335 = vmatprep.subr.mxu0 0.0
    %336 = vmatpush1.msra.mxu0 0.0
    %337 = vmatprep.subr.mxu0 0.0
    %338 = vmatpush1.msra.mxu0 0.0
    %339 = vmatprep.subr.mxu0 0.0
    %340 = vmatpush1.msra.mxu0 0.0
    %341 = vmatprep.subr.mxu0 0.0
    %342 = vmatpush1.msra.mxu0 0.0
    %343 = vmatprep.subr.mxu0 0.0
    %344 = vmatpush1.msra.mxu0 0.0
    %345 = vmatprep.subr.mxu0 0.0
    %346 = vmatpush1.msra.mxu0 0.0
    %347 = vmatprep.subr.mxu0 0.0
    %348 = vmatpush1.msra.mxu0 0.0
    %349 = vmatprep.subr.mxu0 0.0
    %350 = vmatpush1.msra.mxu0 0.0
    %351 = vmatprep.subr.mxu0 0.0
    %352 = vmatpush1.msra.mxu0 0.0
    %353 = vmatprep.subr.mxu0 0.0
    %354 = vmatpush1.msra.mxu0 %v64
    %355 = vmatprep.subr.mxu0 0.0
    %356 = vmatpush1.msra.mxu0 %v61
    %357 = vmatprep.subr.mxu0 0.0
    %358 = vmatpush1.msra.mxu0 %v58
    %359 = vmatprep.subr.mxu0 0.0
    %360 = vmatpush1.msra.mxu0 %v55
    %361 = vmatprep.subr.mxu0 0.0
    %362 = vmatpush2.msra.mxu0 0.0
    %363 = vmatprep.subr.mxu0 0.0
    %364 = vmatpush2.msra.mxu0 0.0
    %365 = vmatprep.subr.mxu0 0.0
    %366 = vmatpush2.msra.mxu0 0.0
    %367 = vmatprep.subr.mxu0 0.0
    %368 = vmatpush2.msra.mxu0 0.0
    %369 = vmatprep.subr.mxu0 0.0
    %370 = vmatpush2.msra.mxu0 0.0
    %371 = vmatprep.subr.mxu0 0.0
    %372 = vmatpush2.msra.mxu0 0.0
    %373 = vmatprep.subr.mxu0 0.0
    %374 = vmatpush2.msra.mxu0 0.0
    %375 = vmatprep.subr.mxu0 0.0
    %376 = vmatpush2.msra.mxu0 0.0
    %377 = vmatprep.subr.mxu0 0.0
    %378 = vmatpush2.msra.mxu0 0.0
    %379 = vmatprep.subr.mxu0 0.0
    %380 = vmatpush2.msra.mxu0 0.0
    %381 = vmatprep.subr.mxu0 0.0
    %382 = vmatpush2.msra.mxu0 0.0
    %383 = vmatprep.subr.mxu0 0.0
    %384 = vmatpush2.msra.mxu0 0.0
    %385 = vmatprep.subr.mxu0 0.0
    %386 = vmatpush2.msra.mxu0 0.0
    %387 = vmatprep.subr.mxu0 0.0
    %388 = vmatpush2.msra.mxu0 0.0
    %389 = vmatprep.subr.mxu0 0.0
    %390 = vmatpush2.msra.mxu0 0.0
    %391 = vmatprep.subr.mxu0 0.0
    %392 = vmatpush2.msra.mxu0 0.0
    %393 = vmatprep.mubr.f32.mxu0 0.0
    %394 = vmatmul.mubr.f32.gmra.mxu0 %v327
    %v395 = vpop.f32.mrf.mxu0
    %v396 = vadd.f32 %v325, %v395
    %v397 = vpop.f32.mrf.mxu0
    %398 = vdwg.mxu0
    %v399 = vxor.u32 %v396, 2147483648
    %v400 = vmul.f32 %v399, 1.442695
    %v401 = vpow.pop %v400
    %v402 = vadd.f32 %v401, 1.0
    %v403 = vrcp.pop %v402
    %v404 = vmul.f32 1.0, %v403
    %v405 = vlaneseq
    %v406 = vand.u32 %v405, 127
    %vm407 = vcmp.lt.s32.totalorder %v406, 32
    %v408 = vsel %vm407, %v404, %v227
    %409 = vst [vmem:[#allocation8] sm:$0xff] %v408
    // Predicated region
    $region26: #{tpu_custom_call.1} parent=1 // pred_check
      _
    $region27: #{tpu_custom_call.1} parent=1 // pred_check_branch
      %411 = sbr.rel (0) target = $region29
    $region28: #{tpu_custom_call.1} parent=1 // pred_region
      %s413 = ssub.s32 128, 128
      %414 = vsyncadd [#allocation4], %s413
      %s416 = sshll.u32 [#allocation8], 4
      %s417 = int_to_ptr.vmem [resolvable:$true] %s416
      %419 = dma.vmem_to_hbm [thread:$0]  %s417, 128, %s3, [#allocation4]
    $region29: #{tpu_custom_call.1} parent=1 // pred_fallthru
      _
    // Predicated region
    $region30: #{tpu_custom_call.1} parent=1 // pred_check
      _
    $region31: #{tpu_custom_call.1} parent=1 // pred_check_branch
      %421 = sbr.rel (0) target = $region33
    $region32: #{tpu_custom_call.1} parent=1 // pred_region
      %422 = dma.done [#allocation4], 128
    $region33: #{tpu_custom_call.1} parent=1 // pred_fallthru
      _
    %423 = vsyncpa [#allocation3], 1
    %424 = vsyncpa [#allocation6], 1
    %425 = vsyncpa [#allocation4], 1

</llo_original>
